<compile_context>
chip_gen: v5e
topology: v5e:2x2
jax: 0.10.0
libtpu: 0.0.40
codegen_flags: <defaults>
</compile_context>

<pallas_src>
import jax
import jax.numpy as jnp
from jax.experimental import pallas as pl
from jax.experimental.pallas import tpu as pltpu


def _round_up(v, m):
    return ((v + m - 1) // m) * m


# ---------------------------------------------------------------------------
# Stage 1:  support = x @ W            (one (tk, Fin) @ (Fin, Fout_pad) per step)
# ---------------------------------------------------------------------------
def _support_kernel(x_ref, w_ref, o_ref):
    # x_ref: (1, tk, Fin)   w_ref: (Fin, Fout_pad)   o_ref: (1, tk, Fout_pad)
    a = x_ref[0].astype(w_ref.dtype)       # no-op unless compute_dtype is set
    o_ref[0] = jnp.dot(a, w_ref[...],
                       preferred_element_type=jnp.float32).astype(o_ref.dtype)


# ---------------------------------------------------------------------------
# Stage 2:  out = adj @ support + bias   (tiled rows x reduction, f32 accumulator)
# ---------------------------------------------------------------------------
def _adj_bmm_kernel(adj_ref, s_ref, bias_ref, o_ref, acc_ref):
    # adj_ref: (1, tm, tk)   s_ref: (1, tk, Fout_pad)   bias_ref: (1, Fout_pad)
    # o_ref:   (1, tm, Fout_pad)   acc_ref: (tm, Fout_pad) f32
    k = pl.program_id(2)

    @pl.when(k == 0)
    def _init():
        acc_ref[...] = jnp.zeros_like(acc_ref)

    a = adj_ref[0].astype(s_ref.dtype)     # bf16 MXU path when compute_dtype set
    acc_ref[...] += jnp.dot(a, s_ref[0], preferred_element_type=jnp.float32)

    @pl.when(k == pl.num_programs(2) - 1)
    def _finalize():
        o_ref[0] = (acc_ref[...] + bias_ref[...]).astype(o_ref.dtype)


def batch_agc(x, adj, weight, bias=None, *, block_m=512, block_k=512,
              compute_dtype=None, vmem_limit_bytes=32 * 1024 * 1024):
    """Pallas implementation of BatchAGC.forward.

    x:      (B, N, Fin)
    adj:    (B, N, N)
    weight: (Fin, Fout)
    bias:   (Fout,) or None
    compute_dtype: optional dtype (e.g. jnp.bfloat16) for the MXU operands of
                   both matmuls; accumulation stays f32.
    returns (B, N, Fout) in x.dtype
    """
    B, N, Fin = x.shape
    assert adj.shape == (B, N, N)
    assert weight.shape[0] == Fin
    Fout = weight.shape[1]
    out_dtype = x.dtype

    # Tile sizes: tm (adj rows) multiple of 8, tk (reduction / adj cols) multiple
    # of 128; clamp to the (padded) problem size.
    tm = min(_round_up(block_m, 8), _round_up(N, 8))
    tk = min(_round_up(block_k, 128), _round_up(N, 128))
    n_m = _round_up(N, tm)            # padded row extent
    n_k = _round_up(N, tk)            # padded reduction extent
    f_out_p = _round_up(Fout, 128)    # lane-dense output width

    # --- pad inputs (all no-ops when already aligned) --------------------------
    x_p = x if n_k == N else jnp.pad(x, ((0, 0), (0, n_k - N), (0, 0)))
    adj_p = adj
    if n_m != N or n_k != N:
        adj_p = jnp.pad(adj, ((0, 0), (0, n_m - N), (0, n_k - N)))
    w_p = weight if f_out_p == Fout else jnp.pad(weight, ((0, 0), (0, f_out_p - Fout)))

    if bias is None:
        b_p = jnp.zeros((f_out_p,), dtype=jnp.float32)
    else:
        b_p = bias.astype(jnp.float32)
        if f_out_p != Fout:
            b_p = jnp.pad(b_p, (0, f_out_p - Fout))
    b2d = b_p.reshape(1, f_out_p)

    support_dtype = compute_dtype if compute_dtype is not None else x.dtype
    if compute_dtype is not None:
        w_p = w_p.astype(compute_dtype)

    cparams1 = pltpu.CompilerParams(
        dimension_semantics=("parallel", "parallel"),
        vmem_limit_bytes=vmem_limit_bytes,
    )
    cparams2 = pltpu.CompilerParams(
        dimension_semantics=("parallel", "parallel", "arbitrary"),
        vmem_limit_bytes=vmem_limit_bytes,
    )

    # --- stage 1: support = x @ W  -> (B, n_k, f_out_p) ------------------------
    support = pl.pallas_call(
        _support_kernel,
        out_shape=jax.ShapeDtypeStruct((B, n_k, f_out_p), support_dtype),
        grid_spec=pltpu.PrefetchScalarGridSpec(
            num_scalar_prefetch=0,
            grid=(B, n_k // tk),
            in_specs=[
                pl.BlockSpec((1, tk, Fin), lambda b, j: (b, j, 0)),
                pl.BlockSpec((Fin, f_out_p), lambda b, j: (0, 0)),
            ],
            out_specs=pl.BlockSpec((1, tk, f_out_p), lambda b, j: (b, j, 0)),
        ),
        compiler_params=cparams1,
    )(x_p, w_p)

    # --- stage 2: out = adj @ support + bias -> (B, n_m, f_out_p) --------------
    out_p = pl.pallas_call(
        _adj_bmm_kernel,
        out_shape=jax.ShapeDtypeStruct((B, n_m, f_out_p), out_dtype),
        grid_spec=pltpu.PrefetchScalarGridSpec(
            num_scalar_prefetch=0,
            grid=(B, n_m // tm, n_k // tk),
            in_specs=[
                pl.BlockSpec((1, tm, tk), lambda b, i, k: (b, i, k)),       # adj tile
                pl.BlockSpec((1, tk, f_out_p), lambda b, i, k: (b, k, 0)),  # support tile
                pl.BlockSpec((1, f_out_p), lambda b, i, k: (0, 0)),         # bias
            ],
            out_specs=pl.BlockSpec((1, tm, f_out_p), lambda b, i, k: (b, i, 0)),
            scratch_shapes=[pltpu.VMEM((tm, f_out_p), jnp.float32)],
        ),
        compiler_params=cparams2,
    )(adj_p, support, b2d)

    if n_m != N or f_out_p != Fout:
        out_p = out_p[:, :N, :Fout]
    return out_p


def xavier_uniform(key, shape, dtype=jnp.float32):
    """Matches torch.nn.init.xavier_uniform_ (gain=1)."""
    fan_in, fan_out = shape
    limit = (6.0 / (fan_in + fan_out)) ** 0.5
    return jax.random.uniform(key, shape, dtype, minval=-limit, maxval=limit)


def _reference(x, adj, weight, bias):
    out = jnp.einsum("bnm,bmf->bnf", adj,
                     jnp.einsum("bni,io->bno", x, weight))
    if bias is not None:
        out = out + bias
    return out


if __name__ == "__main__":
    key = jax.random.PRNGKey(0)

    # --- case 1: the module's small test shape (exercises padding paths) ------
    B, N, Fin, Fout = 2, 16, 32, 32
    k_x, k_adj, k_w, k_b = jax.random.split(key, 4)
    x = jax.random.normal(k_x, (B, N, Fin), dtype=jnp.float32)
    adj = jax.random.normal(k_adj, (B, N, N), dtype=jnp.float32)
    weight = xavier_uniform(k_w, (Fin, Fout))
    bias = 0.1 * jax.random.normal(k_b, (Fout,), dtype=jnp.float32)

    out = jax.block_until_ready(batch_agc(x, adj, weight, bias))
    ref = _reference(x, adj, weight, bias)
    assert out.shape == (B, N, Fout)
    assert jnp.allclose(out, ref, atol=1e-4, rtol=1e-4)

    # bias=None path
    out_nb = jax.block_until_ready(batch_agc(x, adj, weight, None))
    assert jnp.allclose(out_nb, _reference(x, adj, weight, None), atol=1e-4, rtol=1e-4)

    # bf16 MXU path (f32 accumulation) -- looser tolerance
    out_bf = jax.block_until_ready(
        batch_agc(x, adj, weight, bias, compute_dtype=jnp.bfloat16))
    assert jnp.allclose(out_bf, ref, atol=1e-1, rtol=2e-2)

    # --- case 2: multi-tile grid (exercises the k-accumulator across steps) ---
    B2, N2, Fin2, Fout2 = 2, 256, 32, 32
    k_x2, k_adj2 = jax.random.split(k_b, 2)
    x2 = jax.random.normal(k_x2, (B2, N2, Fin2), dtype=jnp.float32)
    adj2 = jax.random.normal(k_adj2, (B2, N2, N2), dtype=jnp.float32)

    out2 = jax.block_until_ready(
        batch_agc(x2, adj2, weight, bias, block_m=128, block_k=128))
    ref2 = _reference(x2, adj2, weight, bias)
    assert out2.shape == (B2, N2, Fout2)
    assert jnp.allclose(out2, ref2, atol=1e-3, rtol=1e-4)

    print("KERNEL_OK")
</pallas_src>

<mosaic_0001>
module attributes {stable_mosaic.version = 11 : i64} {
  func.func @_support_kernel(%arg0: i32, %arg1: i32, %arg2: memref<1x128x32xf32, #tpu.memory_space<vmem>>, %arg3: memref<32x128xf32, #tpu.memory_space<vmem>>, %arg4: memref<1x128x128xf32, #tpu.memory_space<vmem>>) attributes {dimension_semantics = [#tpu.dimension_semantics<parallel>, #tpu.dimension_semantics<parallel>], iteration_bounds = array<i64: 2, 1>, scalar_prefetch = 0 : i64, scratch_operands = 0 : i64, tpu.core_type = #tpu.core_type<tc>, window_params = [{transform_indices = @transform_0, window_bounds = array<i64: 1, 128, 32>}, {pipeline_mode = #tpu.pipeline_mode<synchronous>, transform_indices = @transform_1, window_bounds = array<i64: 32, 128>}, {transform_indices = @transform_2, window_bounds = array<i64: 1, 128, 128>}]} {
    %c0 = arith.constant 0 : index
    %c0_0 = arith.constant 0 : index
    %c0_1 = arith.constant 0 : index
    %0 = vector.load %arg2[%c0, %c0_0, %c0_1] : memref<1x128x32xf32, #tpu.memory_space<vmem>>, vector<1x128x32xf32>
    %1 = vector.shape_cast %0 : vector<1x128x32xf32> to vector<128x32xf32>
    %c0_2 = arith.constant 0 : index
    %c0_3 = arith.constant 0 : index
    %2 = vector.load %arg3[%c0_2, %c0_3] : memref<32x128xf32, #tpu.memory_space<vmem>>, vector<32x128xf32>
    %cst = arith.constant dense<0.000000e+00> : vector<128x128xf32>
    %3 = tpu.matmul %1, %2, %cst {dimension_numbers = #tpu.dot_dimension_numbers<[1], [0], [0], [1], [0, 0, 1, 1], [], []>} : vector<128x32xf32>, vector<32x128xf32>, vector<128x128xf32> -> vector<128x128xf32>
    %c0_4 = arith.constant 0 : index
    %c0_5 = arith.constant 0 : index
    %c0_6 = arith.constant 0 : index
    %4 = vector.load %arg4[%c0_4, %c0_5, %c0_6] : memref<1x128x128xf32, #tpu.memory_space<vmem>>, vector<1x128x128xf32>
    %5 = vector.shape_cast %4 : vector<1x128x128xf32> to vector<128x128xf32>
    %6 = vector.shape_cast %3 : vector<128x128xf32> to vector<1x128x128xf32>
    tpu.vector_store %arg4[%c0_4, %c0_5, %c0_6], %6 {strides = array<i32>} : memref<1x128x128xf32, #tpu.memory_space<vmem>>, vector<1x128x128xf32>,
    return
  }
  func.func @transform_0(%arg0: i32, %arg1: i32) -> (i32, i32, i32) {
    %c0_i32 = arith.constant 0 : i32
    %c0_i32_0 = arith.constant 0 : i32
    return %arg0, %arg1, %c0_i32 : i32, i32, i32
  }
  func.func @transform_1(%arg0: i32, %arg1: i32) -> (i32, i32) {
    %c0_i32 = arith.constant 0 : i32
    %c0_i32_0 = arith.constant 0 : i32
    %c0_i32_1 = arith.constant 0 : i32
    return %c0_i32, %c0_i32_0 : i32, i32
  }
  func.func @transform_2(%arg0: i32, %arg1: i32) -> (i32, i32, i32) {
    %c0_i32 = arith.constant 0 : i32
    %c0_i32_0 = arith.constant 0 : i32
    return %arg0, %arg1, %c0_i32 : i32, i32, i32
  }
}

</mosaic_0001>

<llo_original>
// kernel: tpu_custom_call.1
$region0: #{tpu_custom_call.1}
  #allocation0 [shape = 'u32[]', space=smem, size = 0x4, offset = 0x4, fixed_abs, tag = 'smem constant byte address 0x4 - core index']
  #allocation1 [shape = 'u32[72,128]{1,0:T(1,128)}', space=vmem, size = 0x9000, scoped, tag = 'internal scratch']
  %s0 = inlined_call_operand.vmem [shape: f32[2,128,32], index: 0, kind: input, shape index: {}]
  %s1 = inlined_call_operand.vmem [shape: f32[32,128], index: 1, kind: input, shape index: {}]
  %s2 = inlined_call_operand.hbm [shape: f32[2,128,128], index: 2, kind: output, shape index: {}]
  %s3 = sld [smem:[#allocation0]]
  $region41: #{tpu_custom_call.1} parent=0
    _
  %s5 = ssub.s32 1, %s3
  %s6 = scalar_select 0, %s5, %s3
  $region1: #{tpu_custom_call.1} parent=0
    #allocation2 [shape = 'u8[131072]{0}', space=vmem, size = 0x20000, scoped, tag = 'output window, operand 0']
    #allocation3 [shape = 's32[2]{0}', space=sflag, size = 0x8, scoped, tag = 'scoped memory for tpu_custom_call.1']
    %7 = vsyncpa [#allocation3], 0
    %s8 = scalar_lea.sflag [#allocation3], 1
    %9 = vsyncpa %s8, 0
    loop: start=0, step=1, limit=4
    $region2: #{tpu_custom_call.1} parent=1 // loop_pre_header
      _
    $region3: #{tpu_custom_call.1} parent=1 // loop_header
      %s11 = sphi 0, %s15
      %p12 = scmp.ge.s32.totalorder %s11, 4
      %s18 = sphi 0, %s30
      %s19 = sphi 0, %s26
      %s20 = sphi 0, %s18
      %s21 = sphi 0, %s19
      %s22 = sphi 0, %s20
      %s23 = sphi 0, %s21
      %s35 = sphi 0, %s37
      %s38 = sphi 0, %s35
      %s39 = sphi 0, %s38
      %s55 = sphi 0, %s39
      %s59 = sphi 0, %s59
      %s61 = sphi 0, %s59
      %s62 = sphi 0, %s61
      %s76 = sphi 0, %s62
      %s84 = sphi 0, %s86
      %s87 = sphi 0, %s84
      %s88 = sphi 0, %s87
      %s104 = sphi 0, %s88
    $region4: #{tpu_custom_call.1} parent=1 // loop_header_branch
      %14 = sbr.rel (%p12) target = $region8
    $region5: #{tpu_custom_call.1} parent=1 // loop_body
      %s16 = ssub.s32 %s11, 1
      %s17 = ssub.s32 %s11, 2
      %s24 = sadd.s32 1, %s19
      %p25 = scmp.ge.s32.totalorder %s24, 1
      %s26 = scalar_select %p25, 0, %s24
      %s27 = sadd.s32 1, %s18
      %s28 = scalar_select %p25, %s27, %s18
      %p29 = scmp.ge.s32.totalorder %s28, 2
      %s30 = scalar_select %p29, 0, %s28
      %s31 = ssub.s32 %s18, %s30
      %s32 = ssub.s32 %s19, %s26
      %s33 = sor.u32 %s31, %s32
      %p34 = scmp.eq.s32.totalorder %s33, 0
      %s36 = sadd.s32 %s35, 1
      %s37 = scalar_select %p34, %s35, %s36
      %p40 = pneg %p34
      %p41 = scmp.eq.s32.totalorder %s11, 1
      %p42 = por %p40, %p41
      %p43 = scmp.ne.s32.totalorder %s35, %s38
      %p44 = scmp.eq.s32.totalorder %s11, 0
      %p45 = por %p43, %p44
      %p46 = scmp.ne.s32.totalorder %s35, %s38
      %p47 = scmp.eq.s32.totalorder %s16, 1
      %p48 = por %p46, %p47
      %p49 = scmp.ne.s32.totalorder %s38, %s39
      %p50 = scmp.eq.s32.totalorder %s16, 0
      %p51 = por %p49, %p50
      %p52 = scmp.ne.s32.totalorder %s38, %s39
      %p53 = scmp.eq.s32.totalorder %s17, 1
      %p54 = por %p52, %p53
      %p56 = scmp.ne.s32.totalorder %s39, %s55
      %p57 = scmp.eq.s32.totalorder %s17, 0
      %p58 = por %p56, %p57
      %s60 = sadd.s32 %s59, 1
      %p63 = scmp.eq.s32.totalorder %s11, 1
      %p64 = scmp.ne.s32.totalorder %s59, %s61
      %p65 = scmp.eq.s32.totalorder %s11, 0
      %p66 = por %p64, %p65
      %p67 = scmp.ne.s32.totalorder %s59, %s61
      %p68 = scmp.eq.s32.totalorder %s16, 1
      %p69 = por %p67, %p68
      %p70 = scmp.ne.s32.totalorder %s61, %s62
      %p71 = scmp.eq.s32.totalorder %s16, 0
      %p72 = por %p70, %p71
      %p73 = scmp.ne.s32.totalorder %s61, %s62
      %p74 = scmp.eq.s32.totalorder %s17, 1
      %p75 = por %p73, %p74
      %p77 = scmp.ne.s32.totalorder %s62, %s76
      %p78 = scmp.eq.s32.totalorder %s17, 0
      %p79 = por %p77, %p78
      %s80 = ssub.s32 %s18, %s30
      %s81 = ssub.s32 %s19, %s26
      %s82 = sor.u32 %s80, %s81
      %p83 = scmp.eq.s32.totalorder %s82, 0
      %s85 = sadd.s32 %s84, 1
      %s86 = scalar_select %p83, %s84, %s85
      %p89 = pneg %p83
      %p90 = scmp.eq.s32.totalorder %s11, 1
      %p91 = por %p89, %p90
      %p92 = scmp.ne.s32.totalorder %s84, %s87
      %p93 = scmp.eq.s32.totalorder %s11, 0
      %p94 = por %p92, %p93
      %p95 = scmp.ne.s32.totalorder %s84, %s87
      %p96 = scmp.eq.s32.totalorder %s16, 1
      %p97 = por %p95, %p96
      %p98 = scmp.ne.s32.totalorder %s87, %s88
      %p99 = scmp.eq.s32.totalorder %s16, 0
      %p100 = por %p98, %p99
      %p101 = scmp.ne.s32.totalorder %s87, %s88
      %p102 = scmp.eq.s32.totalorder %s17, 1
      %p103 = por %p101, %p102
      %p105 = scmp.ne.s32.totalorder %s88, %s104
      %p106 = scmp.eq.s32.totalorder %s17, 0
      %p107 = por %p105, %p106
      %p108 = scmp.le.s32.totalorder 1, %s11
      %p109 = scmp.lt.s32.totalorder %s11, 3
      %p110 = pnand %p108, %p109
      %p111 = pneg %p110
      // Predicated region
      $region9: #{tpu_custom_call.1} parent=5 // pred_check
        _
      $region10: #{tpu_custom_call.1} parent=5 // pred_check_branch
        %113 = sbr.rel (%p110) target = $region12
      $region11: #{tpu_custom_call.1} parent=5 // pred_region
        %s114 = ssub.s32 %s11, 1
        // Predicated region
        $region13: #{tpu_custom_call.1} parent=11 // pred_check
          %p115 = pneg %p72
        $region14: #{tpu_custom_call.1} parent=11 // pred_check_branch
          %117 = sbr.rel (%p115) target = $region16
        $region15: #{tpu_custom_call.1} parent=11 // pred_region
          _
        $region16: #{tpu_custom_call.1} parent=11 // pred_fallthru
          _
      $region12: #{tpu_custom_call.1} parent=5 // pred_fallthru
        _
      %p118 = scmp.lt.s32.totalorder %s11, 2
      // Predicated region
      $region17: #{tpu_custom_call.1} parent=5 // pred_check
        %p119 = pneg %p118
      $region18: #{tpu_custom_call.1} parent=5 // pred_check_branch
        %121 = sbr.rel (%p119) target = $region20
      $region19: #{tpu_custom_call.1} parent=5 // pred_region
        // Predicated region
        $region21: #{tpu_custom_call.1} parent=19 // pred_check
          %p122 = pneg %p45
        $region22: #{tpu_custom_call.1} parent=19 // pred_check_branch
          %124 = sbr.rel (%p122) target = $region24
        $region23: #{tpu_custom_call.1} parent=19 // pred_region
          %s125 = smul.u32 16, %s19
          %p126 = scmp.lt.s32.totalorder %s18, 1
          %s127 = scalar_select %p126, %s18, 1
          %p128 = scmp.lt.s32.totalorder %s125, 15
          %s129 = scalar_select %p128, %s125, 15
          %s130 = smul.addr %s127, 16
          %s131 = sadd.s32 %s129, %s130
          %s132 = smul.addr %s131, 8
          %s133 = scalar_lea.vmem %s0, %s132
          %s134 = smul.u32 16, %s19
        $region24: #{tpu_custom_call.1} parent=19 // pred_fallthru
          _
      $region20: #{tpu_custom_call.1} parent=5 // pred_fallthru
        _
      %p135 = scmp.le.s32.totalorder 1, %s11
      %p136 = scmp.lt.s32.totalorder %s11, 3
      %p137 = pnand %p135, %p136
      %p138 = pneg %p137
      // Predicated region
      $region25: #{tpu_custom_call.1} parent=5 // pred_check
        _
      $region26: #{tpu_custom_call.1} parent=5 // pred_check_branch
        %140 = sbr.rel (%p137) target = $region28
      $region27: #{tpu_custom_call.1} parent=5 // pred_region
        %s141 = ssub.s32 %s11, 1
        %s142 = smul.u32 16, %s21
        %p143 = scmp.lt.s32.totalorder %s20, 1
        %s144 = scalar_select %p143, %s20, 1
        %p145 = scmp.lt.s32.totalorder %s142, 15
        %s146 = scalar_select %p145, %s142, 15
        %s147 = smul.addr %s144, 16
        %s148 = sadd.s32 %s146, %s147
        %s149 = smul.addr %s148, 8
        %s150 = scalar_lea.vmem %s0, %s149
        %p151 = pneg %p51
        %p152 = pneg %p48
        %p153 = pneg %p72
        %p154 = pneg %p69
        %p155 = pneg %p100
        %p156 = pneg %p97
        %s157 = sand.u32 %s87, 1
        %s158 = scalar_lea.sflag [#allocation3], %s157
        %s159 = sand.u32 %s87, 1
        %s160 = smul.addr %s159, 128
        %s161 = scalar_lea.vmem [#allocation2], %s160
        %s162 = smul.u32 16, %s21
        %p163 = scmp.lt.s32.totalorder %s20, 1
        %s164 = scalar_select %p163, %s20, 1
        %p165 = scmp.lt.s32.totalorder %s162, 15
        %s166 = scalar_select %p165, %s162, 15
        %s167 = smul.addr %s164, 16
        %s168 = sadd.s32 %s166, %s167
        %s169 = smul.addr %s168, 8
        %s170 = scalar_lea.vmem %s0, %s169
        %s171 = smul.u32 16, %s21
        %s172 = smul.u32 16, %s21
        %v173 = vld [vmem:[%s170] sm:$0xff]
        %v174 = vld [vmem:[%s170 + $0x8] sm:$0xff]
        %v175 = vld [vmem:[%s170 + $0x10] sm:$0xff]
        %v176 = vld [vmem:[%s170 + $0x18] sm:$0xff]
        %v177 = vld [vmem:[%s170 + $0x20] sm:$0xff]
        %v178 = vld [vmem:[%s170 + $0x28] sm:$0xff]
        %v179 = vld [vmem:[%s170 + $0x30] sm:$0xff]
        %v180 = vld [vmem:[%s170 + $0x38] sm:$0xff]
        %v181 = vld [vmem:[%s170 + $0x40] sm:$0xff]
        %v182 = vld [vmem:[%s170 + $0x48] sm:$0xff]
        %v183 = vld [vmem:[%s170 + $0x50] sm:$0xff]
        %v184 = vld [vmem:[%s170 + $0x58] sm:$0xff]
        %v185 = vld [vmem:[%s170 + $0x60] sm:$0xff]
        %v186 = vld [vmem:[%s170 + $0x68] sm:$0xff]
        %v187 = vld [vmem:[%s170 + $0x70] sm:$0xff]
        %v188 = vld [vmem:[%s170 + $0x78] sm:$0xff]
        %v189 = vld [vmem:[%s1] sm:$0xff]
        %v190 = vld [vmem:[%s1 + $0x8] sm:$0xff]
        %v191 = vld [vmem:[%s1 + $0x10] sm:$0xff]
        %v192 = vld [vmem:[%s1 + $0x18] sm:$0xff]
        %vm193 = vcmask 261120
        %v195 = vsel %vm193, %v173, 0
        %v198 = vsel %vm193, %v174, 0
        %v201 = vsel %vm193, %v175, 0
        %v204 = vsel %vm193, %v176, 0
        %v207 = vsel %vm193, %v177, 0
        %v210 = vsel %vm193, %v178, 0
        %v213 = vsel %vm193, %v179, 0
        %v216 = vsel %vm193, %v180, 0
        %v219 = vsel %vm193, %v181, 0
        %v222 = vsel %vm193, %v182, 0
        %v225 = vsel %vm193, %v183, 0
        %v228 = vsel %vm193, %v184, 0
        %v231 = vsel %vm193, %v185, 0
        %v234 = vsel %vm193, %v186, 0
        %v237 = vsel %vm193, %v187, 0
        %v240 = vsel %vm193, %v188, 0
        %242 = vmatpush.msra.mxu0 0.0
        %243 = vmatpush.msra.mxu0 0.0
        %244 = vmatpush.msra.mxu0 0.0
        %245 = vmatpush.msra.mxu0 0.0
        %246 = vmatpush.msra.mxu0 0.0
        %247 = vmatpush.msra.mxu0 0.0
        %248 = vmatpush.msra.mxu0 0.0
        %249 = vmatpush.msra.mxu0 0.0
        %250 = vmatpush.msra.mxu0 0.0
        %251 = vmatpush.msra.mxu0 0.0
        %252 = vmatpush.msra.mxu0 0.0
        %253 = vmatpush.msra.mxu0 0.0
        %254 = vmatpush.msra.mxu0 %v192
        %255 = vmatpush.msra.mxu0 %v191
        %256 = vmatpush.msra.mxu0 %v190
        %257 = vmatpush.msra.mxu0 %v189
        %258 = vmatmul.f32.gmra.mxu0 %v195
        %v259 = vpop.f32.mrf.mxu0
        %v260 = vadd.f32 0.0, %v259
        %261 = vmatmul.f32.gmra.mxu0 %v198
        %v262 = vpop.f32.mrf.mxu0
        %v263 = vadd.f32 0.0, %v262
        %264 = vmatmul.f32.gmra.mxu0 %v201
        %v265 = vpop.f32.mrf.mxu0
        %v266 = vadd.f32 0.0, %v265
        %267 = vmatmul.f32.gmra.mxu0 %v204
        %v268 = vpop.f32.mrf.mxu0
        %v269 = vadd.f32 0.0, %v268
        %270 = vmatmul.f32.gmra.mxu0 %v207
        %v271 = vpop.f32.mrf.mxu0
        %v272 = vadd.f32 0.0, %v271
        %273 = vmatmul.f32.gmra.mxu0 %v210
        %v274 = vpop.f32.mrf.mxu0
        %v275 = vadd.f32 0.0, %v274
        %276 = vmatmul.f32.gmra.mxu0 %v213
        %v277 = vpop.f32.mrf.mxu0
        %v278 = vadd.f32 0.0, %v277
        %279 = vmatmul.f32.gmra.mxu0 %v216
        %v280 = vpop.f32.mrf.mxu0
        %v281 = vadd.f32 0.0, %v280
        %282 = vmatmul.f32.gmra.mxu0 %v219
        %v283 = vpop.f32.mrf.mxu0
        %v284 = vadd.f32 0.0, %v283
        %285 = vmatmul.f32.gmra.mxu0 %v222
        %v286 = vpop.f32.mrf.mxu0
        %v287 = vadd.f32 0.0, %v286
        %288 = vmatmul.f32.gmra.mxu0 %v225
        %v289 = vpop.f32.mrf.mxu0
        %v290 = vadd.f32 0.0, %v289
        %291 = vmatmul.f32.gmra.mxu0 %v228
        %v292 = vpop.f32.mrf.mxu0
        %v293 = vadd.f32 0.0, %v292
        %294 = vmatmul.f32.gmra.mxu0 %v231
        %v295 = vpop.f32.mrf.mxu0
        %v296 = vadd.f32 0.0, %v295
        %297 = vmatmul.f32.gmra.mxu0 %v234
        %v298 = vpop.f32.mrf.mxu0
        %v299 = vadd.f32 0.0, %v298
        %300 = vmatmul.f32.gmra.mxu0 %v237
        %v301 = vpop.f32.mrf.mxu0
        %v302 = vadd.f32 0.0, %v301
        %303 = vmatmul.f32.gmra.mxu0 %v240
        %v304 = vpop.f32.mrf.mxu0
        %v305 = vadd.f32 0.0, %v304
        %306 = vdwg.mxu0
        %307 = vst [vmem:[%s161] sm:$0xff] %v260
        %308 = vst [vmem:[%s161 + $0x8] sm:$0xff] %v263
        %309 = vst [vmem:[%s161 + $0x10] sm:$0xff] %v266
        %310 = vst [vmem:[%s161 + $0x18] sm:$0xff] %v269
        %311 = vst [vmem:[%s161 + $0x20] sm:$0xff] %v272
        %312 = vst [vmem:[%s161 + $0x28] sm:$0xff] %v275
        %313 = vst [vmem:[%s161 + $0x30] sm:$0xff] %v278
        %314 = vst [vmem:[%s161 + $0x38] sm:$0xff] %v281
        %315 = vst [vmem:[%s161 + $0x40] sm:$0xff] %v284
        %316 = vst [vmem:[%s161 + $0x48] sm:$0xff] %v287
        %317 = vst [vmem:[%s161 + $0x50] sm:$0xff] %v290
        %318 = vst [vmem:[%s161 + $0x58] sm:$0xff] %v293
        %319 = vst [vmem:[%s161 + $0x60] sm:$0xff] %v296
        %320 = vst [vmem:[%s161 + $0x68] sm:$0xff] %v299
        %321 = vst [vmem:[%s161 + $0x70] sm:$0xff] %v302
        %322 = vst [vmem:[%s161 + $0x78] sm:$0xff] %v305
        %s323 = sand.u32 %s87, 1
        %s324 = scalar_lea.sflag [#allocation3], %s323
        %s325 = sand.u32 %s87, 1
        %s326 = smul.addr %s325, 128
        %s327 = scalar_lea.vmem [#allocation2], %s326
        // Predicated region
        $region29: #{tpu_custom_call.1} parent=27 // pred_check
          %p328 = pneg %p97
        $region30: #{tpu_custom_call.1} parent=27 // pred_check_branch
          %330 = sbr.rel (%p328) target = $region32
        $region31: #{tpu_custom_call.1} parent=27 // pred_region
          %s331 = smul.u32 16, %s21
          %333 = vsyncadd %s324, 0
          %s334 = smul.addr %s20, 16
          %s335 = sadd.s32 %s331, %s334
          %s336 = smul.addr %s335, 8
          %s337 = scalar_lea.hbm %s2, %s336
          %s338 = sshll.u32 %s327, 4
          %s339 = int_to_ptr.vmem [resolvable:$true] %s338
          %s340 = sshll.u32 %s337, 4
          %s341 = int_to_ptr.hbm [resolvable:$true] %s340
          %346 = dma.vmem_to_hbm [thread:$0]  %s339, 2048, %s341, %s324, 128, 128, 8
        $region32: #{tpu_custom_call.1} parent=27 // pred_fallthru
          _
      $region28: #{tpu_custom_call.1} parent=5 // pred_fallthru
        _
      %p347 = scmp.le.s32.totalorder 2, %s11
      // Predicated region
      $region33: #{tpu_custom_call.1} parent=5 // pred_check
        %p348 = pneg %p347
      $region34: #{tpu_custom_call.1} parent=5 // pred_check_branch
        %350 = sbr.rel (%p348) target = $region36
      $region35: #{tpu_custom_call.1} parent=5 // pred_region
        %s351 = ssub.s32 %s11, 2
        // Predicated region
        $region37: #{tpu_custom_call.1} parent=35 // pred_check
          %p352 = pneg %p103
        $region38: #{tpu_custom_call.1} parent=35 // pred_check_branch
          %354 = sbr.rel (%p352) target = $region40
        $region39: #{tpu_custom_call.1} parent=35 // pred_region
          %s355 = sand.u32 %s88, 1
          %s356 = scalar_lea.sflag [#allocation3], %s355
          %s357 = sand.u32 %s88, 1
          %s358 = smul.addr %s357, 128
          %s359 = scalar_lea.vmem [#allocation2], %s358
          %361 = dma.done %s356, 2048
        $region40: #{tpu_custom_call.1} parent=35 // pred_fallthru
          _
      $region36: #{tpu_custom_call.1} parent=5 // pred_fallthru
        _
    $region6: #{tpu_custom_call.1} parent=1 // loop_footer
      %s15 = sadd.s32 1, %s11
    $region7: #{tpu_custom_call.1} parent=1 // loop_footer_branch
      %10 = sbr.rel target = $region3
    $region8: #{tpu_custom_call.1} parent=1 // loop_exit
      _
    %362 = vsyncpa [#allocation3], 1
    %s363 = scalar_lea.sflag [#allocation3], 1
    %364 = vsyncpa %s363, 1

</llo_original>
